<compile_context>
chip_gen: v5e
topology: v5e:2x2
jax: 0.10.0
libtpu: 0.0.40
codegen_flags: <defaults>
</compile_context>

<pallas_src>
import functools

import jax
import jax.numpy as jnp
from jax.experimental import pallas as pl
from jax.experimental.pallas import tpu as pltpu


def _round_up(a, b):
    return (a + b - 1) // b * b


# ----------------------------- Pallas kernel --------------------------------

def gated_conv_kernel(p_ref, w_ref, b_ref, o_ref):
    """One (batch, spatial-tile) step.

    p_ref : (KKC, TM)      bf16 im2col patch columns (transposed layout)
    w_ref : (2*Cout, KKC)  bf16 fused [W1 ; W2] weight
    b_ref : (2*Cout, 1)    f32  fused [b1 ; b2] bias
    o_ref : (Cout, TM)     f32  gated output tile (already NCHW-flat)
    """
    cout = o_ref.shape[0]
    # Single fused MXU matmul for both convs, f32 accumulation.
    z = jnp.dot(w_ref[...], p_ref[...], preferred_element_type=jnp.float32)
    z = z + b_ref[...]                                     # lane-broadcast bias
    x = z[:cout, :]                                        # feature conv
    m = z[cout:, :]                                        # mask conv
    act = jnp.where(x >= 0.0, x, 0.2 * x)                  # LeakyReLU(0.2) on VPU
    gate = pl.reciprocal(1.0 + jnp.exp(-m), approx=True)   # sigmoid via EUP exp+rcp
    o_ref[...] = (act * gate).astype(o_ref.dtype)


def gated_conv_pallas(patches_t, w_cat_t, b_cat, *, tm):
    """patches_t: [N, KKC, HWp] bf16; w_cat_t: [2*Cout, KKC] bf16; b_cat: [2*Cout,1] f32.

    Returns [N, Cout, HWp] float32 (NCHW-flat; HWp is the padded spatial extent)."""
    N, KKC, HWp = patches_t.shape
    two_cout = w_cat_t.shape[0]
    cout = two_cout // 2
    assert HWp % tm == 0 and tm % 128 == 0

    return pl.pallas_call(
        gated_conv_kernel,
        out_shape=jax.ShapeDtypeStruct((N, cout, HWp), jnp.float32),
        grid=(N, HWp // tm),
        in_specs=[
            pl.BlockSpec((None, KKC, tm), lambda n, i: (n, 0, i)),
            pl.BlockSpec((two_cout, KKC), lambda n, i: (0, 0)),
            pl.BlockSpec((two_cout, 1), lambda n, i: (0, 0)),
        ],
        out_specs=pl.BlockSpec((None, cout, tm), lambda n, i: (n, 0, i)),
        compiler_params=pltpu.CompilerParams(
            dimension_semantics=("parallel", "parallel"),
            vmem_limit_bytes=32 * 1024 * 1024,   # tiles use <1 MiB; fits all gens
        ),
    )(patches_t, w_cat_t, b_cat)


# ------------------------------ JAX glue -------------------------------------

def spectral_normalize(w_oihw, u0, n_iter=1, eps=1e-12):
    """nn.utils.spectral_norm semantics: W / sigma, sigma via power iteration on the
    weight viewed as [Cout, Cin*K*K]."""
    Cout = w_oihw.shape[0]
    wm = w_oihw.reshape(Cout, -1)
    u = u0 / (jnp.linalg.norm(u0) + eps)
    for _ in range(n_iter):
        v = wm.T @ u
        v = v / (jnp.linalg.norm(v) + eps)
        u = wm @ v
        u = u / (jnp.linalg.norm(u) + eps)
    sigma = u @ (wm @ v)
    return w_oihw / sigma


def kaiming_normal(key, shape):
    # nn.init.kaiming_normal_ default: fan_in mode, leaky_relu(a=0) -> std=sqrt(2/fan_in)
    fan_in = shape[1] * shape[2] * shape[3]
    std = (2.0 / fan_in) ** 0.5
    return std * jax.random.normal(key, shape, dtype=jnp.float32)


def gated_module_forward(x_nchw, params, *, K, stride, pad):
    """Full GatedModule forward. Returns NCHW output (float32)."""
    w1 = spectral_normalize(params["w1"], params["u1"])
    w2 = spectral_normalize(params["w2"], params["u2"])
    cout = w1.shape[0]

    # Fused, transposed weight: [2*Cout, K*K*Cin], columns ordered (ki, kj, cin).
    def to_mat(w):  # [Cout, Cin, K, K] -> [Cout, K*K*Cin]
        return jnp.transpose(w, (0, 2, 3, 1)).reshape(cout, -1)

    w_cat_t = jnp.concatenate([to_mat(w1), to_mat(w2)], axis=0).astype(jnp.bfloat16)
    b_cat = jnp.concatenate([params["b1"], params["b2"]]).reshape(2 * cout, 1)
    b_cat = b_cat.astype(jnp.float32)

    N, Cin, H, W = x_nchw.shape
    Hout = (H + 2 * pad - K) // stride + 1
    Wout = (W + 2 * pad - K) // stride + 1
    HW = Hout * Wout

    # Lane tile: as big as possible (<=2048), multiple of 128; pad spatial dim to it.
    tm = min(2048, _round_up(HW, 128))
    HWp = _round_up(HW, tm)

    # Transposed im2col straight from NCHW -> [N, K*K*Cin, HW], stored bf16 in HBM
    # (halves patch-stream bytes; matmul accumulates in f32 inside the kernel).
    xb = x_nchw.astype(jnp.bfloat16)
    xp = jnp.pad(xb, ((0, 0), (0, 0), (pad, pad), (pad, pad)))
    cols = []
    for ki in range(K):
        for kj in range(K):
            sl = xp[:, :, ki:ki + Hout * stride:stride, kj:kj + Wout * stride:stride]
            cols.append(sl.reshape(N, Cin, HW))
    patches_t = jnp.concatenate(cols, axis=1)              # [N, K*K*Cin, HW]
    if HWp != HW:
        patches_t = jnp.pad(patches_t, ((0, 0), (0, 0), (0, HWp - HW)))

    out = gated_conv_pallas(patches_t, w_cat_t, b_cat, tm=tm)   # [N, Cout, HWp]
    return out[:, :, :HW].reshape(N, cout, Hout, Wout)          # already NCHW


# ------------------------------ reference ------------------------------------

def reference_forward(x_nchw, params, *, K, stride, pad):
    w1 = spectral_normalize(params["w1"], params["u1"])
    w2 = spectral_normalize(params["w2"], params["u2"])
    dn = jax.lax.conv_dimension_numbers(x_nchw.shape, w1.shape,
                                        ("NCHW", "OIHW", "NCHW"))
    conv = functools.partial(jax.lax.conv_general_dilated,
                             window_strides=(stride, stride),
                             padding=((pad, pad), (pad, pad)),
                             dimension_numbers=dn)
    x = conv(x_nchw, w1) + params["b1"][None, :, None, None]
    m = conv(x_nchw, w2) + params["b2"][None, :, None, None]
    act = jnp.where(x >= 0.0, x, 0.2 * x)
    return act * jax.nn.sigmoid(m)


# -------------------------------- main ----------------------------------------

if __name__ == "__main__":
    N, Cin, H, W = 2, 4, 16, 16
    Cout, K, stride, pad = 8, 3, 1, 1

    key = jax.random.PRNGKey(0)
    k_x, k_w1, k_w2, k_b1, k_b2, k_u1, k_u2 = jax.random.split(key, 7)

    x = jax.random.normal(k_x, (N, Cin, H, W), dtype=jnp.float32)

    fan_in = Cin * K * K
    bound = 1.0 / (fan_in ** 0.5)
    params = {
        "w1": kaiming_normal(k_w1, (Cout, Cin, K, K)),
        "w2": kaiming_normal(k_w2, (Cout, Cin, K, K)),
        "b1": jax.random.uniform(k_b1, (Cout,), minval=-bound, maxval=bound,
                                 dtype=jnp.float32),
        "b2": jax.random.uniform(k_b2, (Cout,), minval=-bound, maxval=bound,
                                 dtype=jnp.float32),
        "u1": jax.random.normal(k_u1, (Cout,), dtype=jnp.float32),
        "u2": jax.random.normal(k_u2, (Cout,), dtype=jnp.float32),
    }

    out = gated_module_forward(x, params, K=K, stride=stride, pad=pad)
    out = jax.block_until_ready(out)

    ref = reference_forward(x, params, K=K, stride=stride, pad=pad)
    ref = jax.block_until_ready(ref)

    assert out.shape == (N, Cout, H, W), out.shape
    # bf16 matmul inputs (f32 accumulation) + approx reciprocal -> loosened tolerance.
    err = float(jnp.max(jnp.abs(out - ref)))
    assert jnp.allclose(out, ref, atol=3e-2, rtol=3e-2), err

    print("KERNEL_OK")
</pallas_src>

<mosaic_0001>
module attributes {stable_mosaic.version = 11 : i64} {
  func.func @gated_conv_kernel(%arg0: i32, %arg1: i32, %arg2: memref<1x36x256xbf16, #tpu.memory_space<vmem>>, %arg3: memref<16x36xbf16, #tpu.memory_space<vmem>>, %arg4: memref<16x1xf32, #tpu.memory_space<vmem>>, %arg5: memref<1x8x256xf32, #tpu.memory_space<vmem>>) attributes {dimension_semantics = [#tpu.dimension_semantics<parallel>, #tpu.dimension_semantics<parallel>], iteration_bounds = array<i64: 2, 1>, scalar_prefetch = 0 : i64, scratch_operands = 0 : i64, tpu.core_type = #tpu.core_type<tc>, window_params = [{transform_indices = @transform_0, window_bounds = array<i64: 1, 36, 256>}, {pipeline_mode = #tpu.pipeline_mode<synchronous>, transform_indices = @transform_1, window_bounds = array<i64: 16, 36>}, {pipeline_mode = #tpu.pipeline_mode<synchronous>, transform_indices = @transform_2, window_bounds = array<i64: 16, 1>}, {transform_indices = @transform_3, window_bounds = array<i64: 1, 8, 256>}]} {
    %c0 = arith.constant 0 : index
    %c0_0 = arith.constant 0 : index
    %0 = vector.load %arg3[%c0, %c0_0] : memref<16x36xbf16, #tpu.memory_space<vmem>>, vector<16x36xbf16>
    %c0_1 = arith.constant 0 : index
    %c0_2 = arith.constant 0 : index
    %c0_3 = arith.constant 0 : index
    %1 = vector.load %arg2[%c0_1, %c0_2, %c0_3] : memref<1x36x256xbf16, #tpu.memory_space<vmem>>, vector<1x36x256xbf16>
    %2 = vector.shape_cast %1 : vector<1x36x256xbf16> to vector<36x256xbf16>
    %cst = arith.constant dense<0.000000e+00> : vector<16x256xf32>
    %3 = tpu.matmul %0, %2, %cst {dimension_numbers = #tpu.dot_dimension_numbers<[1], [0], [0], [1], [0, 0, 1, 1], [], []>} : vector<16x36xbf16>, vector<36x256xbf16>, vector<16x256xf32> -> vector<16x256xf32>
    %c0_4 = arith.constant 0 : index
    %c0_5 = arith.constant 0 : index
    %4 = vector.load %arg4[%c0_4, %c0_5] : memref<16x1xf32, #tpu.memory_space<vmem>>, vector<16x1xf32>
    %5 = vector.broadcast %4 : vector<16x1xf32> to vector<16x256xf32>
    %6 = arith.addf %3, %5 : vector<16x256xf32>
    %7 = vector.extract_strided_slice %6 {offsets = [0, 0], sizes = [8, 256], strides = [1, 1]} : vector<16x256xf32> to vector<8x256xf32>
    %8 = vector.extract_strided_slice %6 {offsets = [8, 0], sizes = [8, 256], strides = [1, 1]} : vector<16x256xf32> to vector<8x256xf32>
    %cst_6 = arith.constant 0.000000e+00 : f32
    %9 = vector.broadcast %cst_6 : f32 to vector<8x256xf32>
    %10 = arith.cmpf oge, %7, %9 : vector<8x256xf32>
    %cst_7 = arith.constant 2.000000e-01 : f32
    %11 = vector.broadcast %cst_7 : f32 to vector<8x256xf32>
    %12 = arith.mulf %11, %7 : vector<8x256xf32>
    %13 = arith.select %10, %7, %12 : vector<8x256xi1>, vector<8x256xf32>
    %cst_8 = arith.constant 0.000000e+00 : f32
    %14 = vector.broadcast %cst_8 : f32 to vector<8x256xf32>
    %15 = arith.subf %14, %8 : vector<8x256xf32>
    %16 = math.exp %15 : vector<8x256xf32>
    %cst_9 = arith.constant 1.000000e+00 : f32
    %17 = vector.broadcast %cst_9 : f32 to vector<8x256xf32>
    %18 = arith.addf %17, %16 : vector<8x256xf32>
    %19 = tpu.reciprocal %18 {approx = true} : vector<8x256xf32> -> vector<8x256xf32>
    %20 = arith.mulf %13, %19 : vector<8x256xf32>
    %c0_10 = arith.constant 0 : index
    %c0_11 = arith.constant 0 : index
    %c0_12 = arith.constant 0 : index
    %21 = vector.load %arg5[%c0_10, %c0_11, %c0_12] : memref<1x8x256xf32, #tpu.memory_space<vmem>>, vector<1x8x256xf32>
    %22 = vector.shape_cast %21 : vector<1x8x256xf32> to vector<8x256xf32>
    %23 = vector.shape_cast %20 : vector<8x256xf32> to vector<1x8x256xf32>
    tpu.vector_store %arg5[%c0_10, %c0_11, %c0_12], %23 {strides = array<i32>} : memref<1x8x256xf32, #tpu.memory_space<vmem>>, vector<1x8x256xf32>,
    return
  }
  func.func @transform_0(%arg0: i32, %arg1: i32) -> (i32, i32, i32) {
    %c0_i32 = arith.constant 0 : i32
    %c0_i32_0 = arith.constant 0 : i32
    return %arg0, %c0_i32, %arg1 : i32, i32, i32
  }
  func.func @transform_1(%arg0: i32, %arg1: i32) -> (i32, i32) {
    %c0_i32 = arith.constant 0 : i32
    %c0_i32_0 = arith.constant 0 : i32
    %c0_i32_1 = arith.constant 0 : i32
    return %c0_i32, %c0_i32_0 : i32, i32
  }
  func.func @transform_2(%arg0: i32, %arg1: i32) -> (i32, i32) {
    %c0_i32 = arith.constant 0 : i32
    %c0_i32_0 = arith.constant 0 : i32
    %c0_i32_1 = arith.constant 0 : i32
    return %c0_i32, %c0_i32_0 : i32, i32
  }
  func.func @transform_3(%arg0: i32, %arg1: i32) -> (i32, i32, i32) {
    %c0_i32 = arith.constant 0 : i32
    %c0_i32_0 = arith.constant 0 : i32
    return %arg0, %c0_i32, %arg1 : i32, i32, i32
  }
}

</mosaic_0001>

<llo_original>
// kernel: tpu_custom_call.1
$region0: #{tpu_custom_call.1}
  #allocation0 [shape = 'u32[]', space=smem, size = 0x4, offset = 0x4, fixed_abs, tag = 'smem constant byte address 0x4 - core index']
  #allocation1 [shape = 'u32[72,128]{1,0:T(1,128)}', space=vmem, size = 0x9000, scoped, tag = 'internal scratch']
  %s0 = inlined_call_operand.vmem [shape: bf16[2,36,256], index: 0, kind: input, shape index: {}]
  %s1 = inlined_call_operand.vmem [shape: bf16[16,36], index: 1, kind: input, shape index: {}]
  %s2 = inlined_call_operand.vmem [shape: f32[16,1], index: 2, kind: input, shape index: {}]
  %s3 = inlined_call_operand.hbm [shape: f32[2,8,256], index: 3, kind: output, shape index: {}]
  %s4 = sld [smem:[#allocation0]]
  $region45: #{tpu_custom_call.1} parent=0
    _
  %s6 = ssub.s32 1, %s4
  %s7 = scalar_select 0, %s6, %s4
  $region1: #{tpu_custom_call.1} parent=0
    #allocation2 [shape = 'u8[16384]{0}', space=vmem, size = 0x4000, scoped, tag = 'output window, operand 0']
    #allocation3 [shape = 's32[2]{0}', space=sflag, size = 0x8, scoped, tag = 'scoped memory for tpu_custom_call.1']
    %8 = vsyncpa [#allocation3], 0
    %s9 = scalar_lea.sflag [#allocation3], 1
    %10 = vsyncpa %s9, 0
    loop: start=0, step=1, limit=4
    $region2: #{tpu_custom_call.1} parent=1 // loop_pre_header
      _
    $region3: #{tpu_custom_call.1} parent=1 // loop_header
      %s12 = sphi 0, %s16
      %p13 = scmp.ge.s32.totalorder %s12, 4
      %s19 = sphi 0, %s31
      %s20 = sphi 0, %s27
      %s21 = sphi 0, %s19
      %s22 = sphi 0, %s20
      %s23 = sphi 0, %s21
      %s24 = sphi 0, %s22
      %s36 = sphi 0, %s38
      %s39 = sphi 0, %s36
      %s40 = sphi 0, %s39
      %s56 = sphi 0, %s40
      %s60 = sphi 0, %s60
      %s62 = sphi 0, %s60
      %s63 = sphi 0, %s62
      %s77 = sphi 0, %s63
      %s81 = sphi 0, %s81
      %s83 = sphi 0, %s81
      %s84 = sphi 0, %s83
      %s98 = sphi 0, %s84
      %s106 = sphi 0, %s108
      %s109 = sphi 0, %s106
      %s110 = sphi 0, %s109
      %s126 = sphi 0, %s110
    $region4: #{tpu_custom_call.1} parent=1 // loop_header_branch
      %15 = sbr.rel (%p13) target = $region8
    $region5: #{tpu_custom_call.1} parent=1 // loop_body
      %s17 = ssub.s32 %s12, 1
      %s18 = ssub.s32 %s12, 2
      %s25 = sadd.s32 1, %s20
      %p26 = scmp.ge.s32.totalorder %s25, 1
      %s27 = scalar_select %p26, 0, %s25
      %s28 = sadd.s32 1, %s19
      %s29 = scalar_select %p26, %s28, %s19
      %p30 = scmp.ge.s32.totalorder %s29, 2
      %s31 = scalar_select %p30, 0, %s29
      %s32 = ssub.s32 %s19, %s31
      %s33 = ssub.s32 %s20, %s27
      %s34 = sor.u32 %s32, %s33
      %p35 = scmp.eq.s32.totalorder %s34, 0
      %s37 = sadd.s32 %s36, 1
      %s38 = scalar_select %p35, %s36, %s37
      %p41 = pneg %p35
      %p42 = scmp.eq.s32.totalorder %s12, 1
      %p43 = por %p41, %p42
      %p44 = scmp.ne.s32.totalorder %s36, %s39
      %p45 = scmp.eq.s32.totalorder %s12, 0
      %p46 = por %p44, %p45
      %p47 = scmp.ne.s32.totalorder %s36, %s39
      %p48 = scmp.eq.s32.totalorder %s17, 1
      %p49 = por %p47, %p48
      %p50 = scmp.ne.s32.totalorder %s39, %s40
      %p51 = scmp.eq.s32.totalorder %s17, 0
      %p52 = por %p50, %p51
      %p53 = scmp.ne.s32.totalorder %s39, %s40
      %p54 = scmp.eq.s32.totalorder %s18, 1
      %p55 = por %p53, %p54
      %p57 = scmp.ne.s32.totalorder %s40, %s56
      %p58 = scmp.eq.s32.totalorder %s18, 0
      %p59 = por %p57, %p58
      %s61 = sadd.s32 %s60, 1
      %p64 = scmp.eq.s32.totalorder %s12, 1
      %p65 = scmp.ne.s32.totalorder %s60, %s62
      %p66 = scmp.eq.s32.totalorder %s12, 0
      %p67 = por %p65, %p66
      %p68 = scmp.ne.s32.totalorder %s60, %s62
      %p69 = scmp.eq.s32.totalorder %s17, 1
      %p70 = por %p68, %p69
      %p71 = scmp.ne.s32.totalorder %s62, %s63
      %p72 = scmp.eq.s32.totalorder %s17, 0
      %p73 = por %p71, %p72
      %p74 = scmp.ne.s32.totalorder %s62, %s63
      %p75 = scmp.eq.s32.totalorder %s18, 1
      %p76 = por %p74, %p75
      %p78 = scmp.ne.s32.totalorder %s63, %s77
      %p79 = scmp.eq.s32.totalorder %s18, 0
      %p80 = por %p78, %p79
      %s82 = sadd.s32 %s81, 1
      %p85 = scmp.eq.s32.totalorder %s12, 1
      %p86 = scmp.ne.s32.totalorder %s81, %s83
      %p87 = scmp.eq.s32.totalorder %s12, 0
      %p88 = por %p86, %p87
      %p89 = scmp.ne.s32.totalorder %s81, %s83
      %p90 = scmp.eq.s32.totalorder %s17, 1
      %p91 = por %p89, %p90
      %p92 = scmp.ne.s32.totalorder %s83, %s84
      %p93 = scmp.eq.s32.totalorder %s17, 0
      %p94 = por %p92, %p93
      %p95 = scmp.ne.s32.totalorder %s83, %s84
      %p96 = scmp.eq.s32.totalorder %s18, 1
      %p97 = por %p95, %p96
      %p99 = scmp.ne.s32.totalorder %s84, %s98
      %p100 = scmp.eq.s32.totalorder %s18, 0
      %p101 = por %p99, %p100
      %s102 = ssub.s32 %s19, %s31
      %s103 = ssub.s32 %s20, %s27
      %s104 = sor.u32 %s102, %s103
      %p105 = scmp.eq.s32.totalorder %s104, 0
      %s107 = sadd.s32 %s106, 1
      %s108 = scalar_select %p105, %s106, %s107
      %p111 = pneg %p105
      %p112 = scmp.eq.s32.totalorder %s12, 1
      %p113 = por %p111, %p112
      %p114 = scmp.ne.s32.totalorder %s106, %s109
      %p115 = scmp.eq.s32.totalorder %s12, 0
      %p116 = por %p114, %p115
      %p117 = scmp.ne.s32.totalorder %s106, %s109
      %p118 = scmp.eq.s32.totalorder %s17, 1
      %p119 = por %p117, %p118
      %p120 = scmp.ne.s32.totalorder %s109, %s110
      %p121 = scmp.eq.s32.totalorder %s17, 0
      %p122 = por %p120, %p121
      %p123 = scmp.ne.s32.totalorder %s109, %s110
      %p124 = scmp.eq.s32.totalorder %s18, 1
      %p125 = por %p123, %p124
      %p127 = scmp.ne.s32.totalorder %s110, %s126
      %p128 = scmp.eq.s32.totalorder %s18, 0
      %p129 = por %p127, %p128
      %p130 = scmp.le.s32.totalorder 1, %s12
      %p131 = scmp.lt.s32.totalorder %s12, 3
      %p132 = pnand %p130, %p131
      %p133 = pneg %p132
      // Predicated region
      $region9: #{tpu_custom_call.1} parent=5 // pred_check
        _
      $region10: #{tpu_custom_call.1} parent=5 // pred_check_branch
        %135 = sbr.rel (%p132) target = $region12
      $region11: #{tpu_custom_call.1} parent=5 // pred_region
        %s136 = ssub.s32 %s12, 1
        // Predicated region
        $region13: #{tpu_custom_call.1} parent=11 // pred_check
          %p137 = pneg %p73
        $region14: #{tpu_custom_call.1} parent=11 // pred_check_branch
          %139 = sbr.rel (%p137) target = $region16
        $region15: #{tpu_custom_call.1} parent=11 // pred_region
          _
        $region16: #{tpu_custom_call.1} parent=11 // pred_fallthru
          _
        // Predicated region
        $region17: #{tpu_custom_call.1} parent=11 // pred_check
          %p140 = pneg %p94
        $region18: #{tpu_custom_call.1} parent=11 // pred_check_branch
          %142 = sbr.rel (%p140) target = $region20
        $region19: #{tpu_custom_call.1} parent=11 // pred_region
          _
        $region20: #{tpu_custom_call.1} parent=11 // pred_fallthru
          _
      $region12: #{tpu_custom_call.1} parent=5 // pred_fallthru
        _
      %p143 = scmp.lt.s32.totalorder %s12, 2
      // Predicated region
      $region21: #{tpu_custom_call.1} parent=5 // pred_check
        %p144 = pneg %p143
      $region22: #{tpu_custom_call.1} parent=5 // pred_check_branch
        %146 = sbr.rel (%p144) target = $region24
      $region23: #{tpu_custom_call.1} parent=5 // pred_region
        // Predicated region
        $region25: #{tpu_custom_call.1} parent=23 // pred_check
          %p147 = pneg %p46
        $region26: #{tpu_custom_call.1} parent=23 // pred_check_branch
          %149 = sbr.rel (%p147) target = $region28
        $region27: #{tpu_custom_call.1} parent=23 // pred_region
          %s150 = smul.u32 2, %s20
          %p151 = scmp.lt.s32.totalorder %s19, 1
          %s152 = scalar_select %p151, %s19, 1
          %p153 = scmp.lt.s32.totalorder %s150, 1
          %s154 = scalar_select %p153, %s150, 1
          %s155 = smul.addr %s152, 10
          %s156 = sadd.s32 %s154, %s155
          %s157 = smul.addr %s156, 4
          %s158 = scalar_lea.vmem %s0, %s157
          %s159 = smul.u32 2, %s20
        $region28: #{tpu_custom_call.1} parent=23 // pred_fallthru
          _
      $region24: #{tpu_custom_call.1} parent=5 // pred_fallthru
        _
      %p160 = scmp.le.s32.totalorder 1, %s12
      %p161 = scmp.lt.s32.totalorder %s12, 3
      %p162 = pnand %p160, %p161
      %p163 = pneg %p162
      // Predicated region
      $region29: #{tpu_custom_call.1} parent=5 // pred_check
        _
      $region30: #{tpu_custom_call.1} parent=5 // pred_check_branch
        %165 = sbr.rel (%p162) target = $region32
      $region31: #{tpu_custom_call.1} parent=5 // pred_region
        %s166 = ssub.s32 %s12, 1
        %s167 = smul.u32 2, %s22
        %p168 = scmp.lt.s32.totalorder %s21, 1
        %s169 = scalar_select %p168, %s21, 1
        %p170 = scmp.lt.s32.totalorder %s167, 1
        %s171 = scalar_select %p170, %s167, 1
        %s172 = smul.addr %s169, 10
        %s173 = sadd.s32 %s171, %s172
        %s174 = smul.addr %s173, 4
        %s175 = scalar_lea.vmem %s0, %s174
        %p176 = pneg %p52
        %p177 = pneg %p49
        %p178 = pneg %p73
        %p179 = pneg %p70
        %p180 = pneg %p94
        %p181 = pneg %p91
        %p182 = pneg %p122
        %p183 = pneg %p119
        %s184 = sand.u32 %s109, 1
        %s185 = scalar_lea.sflag [#allocation3], %s184
        %s186 = sand.u32 %s109, 1
        %s187 = smul.addr %s186, 16
        %s188 = scalar_lea.vmem [#allocation2], %s187
        %s189 = smul.u32 2, %s22
        %p190 = scmp.lt.s32.totalorder %s21, 1
        %s191 = scalar_select %p190, %s21, 1
        %p192 = scmp.lt.s32.totalorder %s189, 1
        %s193 = scalar_select %p192, %s189, 1
        %s194 = smul.addr %s191, 10
        %s195 = sadd.s32 %s193, %s194
        %s196 = smul.addr %s195, 4
        %s197 = scalar_lea.vmem %s0, %s196
        %s198 = smul.u32 2, %s22
        %s199 = smul.u32 2, %s22
        %v201 = vld [vmem:[%s1] sm:$0xf]
        %v202 = vld [vmem:[%s1 + $0x4] sm:$0xf]
        %v203 = vld [vmem:[%s197] sm:$0xff]
        %v204 = vld [vmem:[%s197 + $0x8] sm:$0xff]
        %v205 = vld [vmem:[%s197 + $0x10] sm:$0xff]
        %v206 = vld [vmem:[%s197 + $0x18] sm:$0xff]
        %v207 = vld [vmem:[%s197 + $0x20] sm:$0x33]
        %v208 = vld [vmem:[%s2] sm:$0xff]
        %v209 = vld [vmem:[%s2 + $0x8] sm:$0xff]
        %211 = vset.pattern.permute.xlu0 0
        %212 = vperm.xlu0 %211, %v208
        %v213 = vpop.permute.xlu0 %212
        %216 = vset.pattern.permute.xlu0 0
        %217 = vperm.xlu0 %216, %v209
        %v218 = vpop.permute.xlu0 %217
        %v222 = vunpack.c.l.b16 %v201
        %v223 = vunpack.c.l.b16 %v202
        %v224 = vpack.c.b16 %v223, %v222
        %v230 = vunpack.c.l.b16 %v203
        %v231 = vunpack.c.h.b16 %v203
        %v232 = vunpack.c.l.b16 %v204
        %v233 = vunpack.c.h.b16 %v204
        %v234 = vunpack.c.l.b16 %v205
        %v235 = vunpack.c.h.b16 %v205
        %v236 = vunpack.c.l.b16 %v206
        %v237 = vunpack.c.h.b16 %v206
        %v238 = vunpack.c.l.b16 %v207
        %v239 = vunpack.c.h.b16 %v207
        %v240 = vpack.c.b16 %v232, %v230
        %v241 = vpack.c.b16 %v233, %v231
        %v242 = vpack.c.b16 %v236, %v234
        %v243 = vpack.c.b16 %v237, %v235
        %v244 = vpack.c.b16 %v238, %v238
        %v245 = vpack.c.b16 %v239, %v239
        %vm250 = vcmask 293888
        %v252 = vsel %vm250, %v224, 0
        %vm254 = vcmask 1041408
        %v256 = vsel %vm254, %v244, 0
        %v259 = vsel %vm254, %v245, 0
        %261 = vmatpush.bf16.msra.mxu0 0
        %262 = vmatpush.bf16.msra.mxu0 0
        %263 = vmatpush.bf16.msra.mxu0 0
        %264 = vmatpush.bf16.msra.mxu0 0
        %265 = vmatpush.bf16.msra.mxu0 0
        %266 = vmatpush.bf16.msra.mxu0 %v256
        %267 = vmatpush.bf16.msra.mxu0 %v242
        %268 = vmatpush.bf16.msra.mxu0 %v240
        %269 = vmatmul.bf16.gmra.mxu0 %v252
        %v270 = vpop.f32.mrf.mxu0
        %v271 = vadd.f32 %v213, %v270
        %v272 = vpop.f32.mrf.mxu0
        %v273 = vadd.f32 %v218, %v272
        %274 = vdwg.mxu0
        %275 = vmatpush.bf16.msra.mxu0 0
        %276 = vmatpush.bf16.msra.mxu0 0
        %277 = vmatpush.bf16.msra.mxu0 0
        %278 = vmatpush.bf16.msra.mxu0 0
        %279 = vmatpush.bf16.msra.mxu0 0
        %280 = vmatpush.bf16.msra.mxu0 %v259
        %281 = vmatpush.bf16.msra.mxu0 %v243
        %282 = vmatpush.bf16.msra.mxu0 %v241
        %283 = vmatmul.bf16.gmra.mxu0 %v252
        %v284 = vpop.f32.mrf.mxu0
        %v285 = vadd.f32 %v213, %v284
        %v286 = vpop.f32.mrf.mxu0
        %v287 = vadd.f32 %v218, %v286
        %288 = vdwg.mxu0
        %vm289 = vcmp.ge.f32.partialorder %v271, 0.0
        %vm290 = vcmp.ge.f32.partialorder %v285, 0.0
        %v291 = vmul.f32 %v271, 0.2
        %v292 = vmul.f32 %v285, 0.2
        %v293 = vsel %vm289, %v271, %v291
        %v294 = vsel %vm290, %v285, %v292
        %v295 = vsub.f32 0.0, %v273
        %v296 = vsub.f32 0.0, %v287
        %v297 = vmul.f32 %v295, 1.442695
        %v298 = vpow.pop %v297
        %v299 = vmul.f32 %v296, 1.442695
        %v300 = vpow.pop %v299
        %v301 = vadd.f32 %v298, 1.0
        %v302 = vadd.f32 %v300, 1.0
        %v303 = vrcp.pop %v301
        %v304 = vrcp.pop %v302
        %v305 = vmul.f32 %v293, %v303
        %v306 = vmul.f32 %v294, %v304
        %307 = vst [vmem:[%s188] sm:$0xff] %v305
        %308 = vst [vmem:[%s188 + $0x8] sm:$0xff] %v306
        %s309 = sand.u32 %s109, 1
        %s310 = scalar_lea.sflag [#allocation3], %s309
        %s311 = sand.u32 %s109, 1
        %s312 = smul.addr %s311, 16
        %s313 = scalar_lea.vmem [#allocation2], %s312
        // Predicated region
        $region33: #{tpu_custom_call.1} parent=31 // pred_check
          %p314 = pneg %p119
        $region34: #{tpu_custom_call.1} parent=31 // pred_check_branch
          %316 = sbr.rel (%p314) target = $region36
        $region35: #{tpu_custom_call.1} parent=31 // pred_region
          %s317 = smul.u32 2, %s22
          %319 = vsyncadd %s310, 0
          %s320 = smul.addr %s21, 2
          %s321 = sadd.s32 %s317, %s320
          %s322 = smul.addr %s321, 8
          %s323 = scalar_lea.hbm %s3, %s322
          %s325 = sshll.u32 %s313, 4
          %s326 = int_to_ptr.vmem [resolvable:$true] %s325
          %s327 = sshll.u32 %s323, 4
          %s328 = int_to_ptr.hbm [resolvable:$true] %s327
          %330 = dma.vmem_to_hbm [thread:$0]  %s326, 256, %s328, %s310
        $region36: #{tpu_custom_call.1} parent=31 // pred_fallthru
          _
      $region32: #{tpu_custom_call.1} parent=5 // pred_fallthru
        _
      %p331 = scmp.le.s32.totalorder 2, %s12
      // Predicated region
      $region37: #{tpu_custom_call.1} parent=5 // pred_check
        %p332 = pneg %p331
      $region38: #{tpu_custom_call.1} parent=5 // pred_check_branch
        %334 = sbr.rel (%p332) target = $region40
      $region39: #{tpu_custom_call.1} parent=5 // pred_region
        %s335 = ssub.s32 %s12, 2
        // Predicated region
        $region41: #{tpu_custom_call.1} parent=39 // pred_check
          %p336 = pneg %p125
        $region42: #{tpu_custom_call.1} parent=39 // pred_check_branch
          %338 = sbr.rel (%p336) target = $region44
        $region43: #{tpu_custom_call.1} parent=39 // pred_region
          %s339 = sand.u32 %s110, 1
          %s340 = scalar_lea.sflag [#allocation3], %s339
          %s341 = sand.u32 %s110, 1
          %s342 = smul.addr %s341, 16
          %s343 = scalar_lea.vmem [#allocation2], %s342
          %345 = dma.done %s340, 256
        $region44: #{tpu_custom_call.1} parent=39 // pred_fallthru
          _
      $region40: #{tpu_custom_call.1} parent=5 // pred_fallthru
        _
    $region6: #{tpu_custom_call.1} parent=1 // loop_footer
      %s16 = sadd.s32 1, %s12
    $region7: #{tpu_custom_call.1} parent=1 // loop_footer_branch
      %11 = sbr.rel target = $region3
    $region8: #{tpu_custom_call.1} parent=1 // loop_exit
      _
    %346 = vsyncpa [#allocation3], 1
    %s347 = scalar_lea.sflag [#allocation3], 1
    %348 = vsyncpa %s347, 1

</llo_original>
